<compile_context>
chip_gen: v5e
topology: v5e:2x2
jax: 0.10.0
libtpu: 0.0.40
codegen_flags: <defaults>
</compile_context>

<pallas_src>
import math

import jax
import jax.numpy as jnp
from jax.experimental import pallas as pl
from jax.experimental.pallas import tpu as pltpu


def _luong_kernel(dec_ref, enc_ref, w_ref, ctx_ref, attw_ref):
    dec = dec_ref[...]            # (bt, Tq, H), native dtype
    enc = enc_ref[...]            # (bt, Tk, H), native dtype
    w = w_ref[...]                # (H, H), torch layout (out, in)

    bt, tq, h = dec.shape

    # dq = dec @ W : fold (bt, Tq) into one M dim for a single MXU-native
    # A[M,K] @ B[K,N] matmul (no transpose, no per-batch tiny matmuls).
    dq = jnp.dot(dec.reshape(bt * tq, h), w,
                 preferred_element_type=jnp.float32)
    # Feed the attention matmuls in the input dtype (bf16 stays bf16) with
    # f32 accumulation; softmax stays in f32.
    dq = dq.astype(dec.dtype).reshape(bt, tq, h)

    # scores = dq @ enc^T : contraction on the last axis of both operands
    # (A @ B^T form) feeds the MXU with zero relayout.
    scores = jnp.einsum("bqh,bkh->bqk", dq, enc,
                        preferred_element_type=jnp.float32)   # (bt, Tq, Tk) f32

    # Numerically-safe softmax over the key axis, in f32, with an EXACT
    # division (the reciprocal is on a (bt, Tq, 1) tensor -> negligible cost,
    # and attn_weights rows sum to 1 to f32 accuracy).
    m = jnp.max(scores, axis=-1, keepdims=True)
    e = jnp.exp(scores - m)
    denom = jnp.sum(e, axis=-1, keepdims=True)
    weights = e * (1.0 / denom)                                # (bt, Tq, Tk) f32

    # context = weights @ enc : contraction on k, standard A @ B form.
    ctx = jnp.einsum("bqk,bkh->bqh", weights.astype(enc.dtype), enc,
                     preferred_element_type=jnp.float32)       # (bt, Tq, H) f32

    ctx_ref[...] = ctx.astype(ctx_ref.dtype)
    attw_ref[...] = weights.astype(attw_ref.dtype)


def _vmem_budget_bytes():
    # Generation-aware budget: ~75% of this chip's per-core VMEM
    # (v5e/v6e: 128 MiB -> 96 MiB budget; v7x: 64 MiB -> 48 MiB budget),
    # leaving headroom for compiler-internal scratch and cast copies.
    try:
        cap = int(pltpu.get_tpu_info().vmem_capacity_bytes)
    except Exception:
        cap = 64 * 1024 * 1024    # conservative fallback (v7x per-TC VMEM)
    return (cap * 3) // 4


def _pick_batch_block(batch, tq, tk, h, in_itemsize, attw_itemsize, budget):
    """Largest batch block that fits the VMEM budget, with >= 2 grid steps."""
    # Per-batch-element cost:
    #   double-buffered I/O blocks (dec + enc + ctx in input dtype, attw in its
    #   own dtype) plus f32 intermediates (dq, scores/exp/weights, ctx acc).
    io_bytes = 2 * ((tq * h + tk * h + tq * h) * in_itemsize
                    + tq * tk * attw_itemsize)
    interm_bytes = (2 * tq * tk + 2 * tq * h) * 4
    per_elem = io_bytes + interm_bytes
    # Resident weight block (still double-buffered by the default pipeline;
    # TODO(synk): single-buffer it via pipeline_mode=pl.Buffered(1) once that
    # mode is verified on all target generations -- its cost is budgeted here).
    w_bytes = 2 * h * h * in_itemsize
    avail = budget - w_bytes
    bt_max = max(1, avail // per_elem)
    # Keep at least 2 grid steps when batch allows so dimension_semantics
    # ("parallel",) can shard the grid across v7x's two TensorCores.
    bt = min(int(bt_max), max(1, -(-batch // 2)))
    return max(1, min(bt, batch))


def luong_attention(decoder_hidden, encoder_outputs, weight, *,
                    block_b=None, attn_weights_dtype=None):
    """decoder_hidden: (B,Tq,H), encoder_outputs: (B,Tk,H), weight: (H,H)."""
    B, Tq, H = decoder_hidden.shape
    Be, Tk, He = encoder_outputs.shape
    assert Be == B and He == H and weight.shape == (H, H)

    out_dtype = decoder_hidden.dtype
    # attn_weights is the largest HBM store; pass attn_weights_dtype=jnp.bfloat16
    # to halve that writeback when full-precision weights aren't needed.
    attw_dtype = jnp.dtype(attn_weights_dtype) if attn_weights_dtype else jnp.dtype(out_dtype)

    budget = _vmem_budget_bytes()
    in_itemsize = jnp.dtype(out_dtype).itemsize
    bt = _pick_batch_block(B, Tq, Tk, H, in_itemsize, attw_dtype.itemsize, budget)
    if block_b is not None:
        bt = max(1, min(bt, int(block_b)))

    # Robust blocking: pad the batch to a multiple of bt instead of shrinking
    # bt to an exact divisor of B (zero-padded rows are benign and sliced off).
    padded_B = pl.cdiv(B, bt) * bt
    dec, enc = decoder_hidden, encoder_outputs
    if padded_B != B:
        pad = padded_B - B
        dec = jnp.pad(dec, ((0, pad), (0, 0), (0, 0)))
        enc = jnp.pad(enc, ((0, pad), (0, 0), (0, 0)))

    grid = (padded_B // bt,)

    # TODO(synk): for very long Tk at production shapes, add a trailing
    # "arbitrary" Tk grid axis with an online softmax (running max/denominator
    # + resident ctx accumulator) so the (bt,Tk,H) enc block and (bt,Tq,Tk)
    # intermediates stop scaling with Tk.
    ctx, attw = pl.pallas_call(
        _luong_kernel,
        out_shape=(
            jax.ShapeDtypeStruct((padded_B, Tq, H), out_dtype),
            jax.ShapeDtypeStruct((padded_B, Tq, Tk), attw_dtype),
        ),
        grid_spec=pltpu.PrefetchScalarGridSpec(
            num_scalar_prefetch=0,
            grid=grid,
            in_specs=[
                pl.BlockSpec((bt, Tq, H), lambda b: (b, 0, 0)),
                pl.BlockSpec((bt, Tk, H), lambda b: (b, 0, 0)),
                pl.BlockSpec((H, H), lambda b: (0, 0)),   # resident across grid
            ],
            out_specs=[
                pl.BlockSpec((bt, Tq, H), lambda b: (b, 0, 0)),
                pl.BlockSpec((bt, Tq, Tk), lambda b: (b, 0, 0)),
            ],
        ),
        compiler_params=pltpu.CompilerParams(
            dimension_semantics=("parallel",),   # shards batch grid on v7x's 2 TCs
            vmem_limit_bytes=int(budget),
        ),
    )(dec, enc, weight)

    if padded_B != B:
        ctx, attw = ctx[:B], attw[:B]
    return ctx, attw


def _reference(decoder_hidden, encoder_outputs, weight):
    # Mirrors the PyTorch module op-for-op, at full f32 matmul precision so it
    # serves as an accurate ground truth for the comparison below.
    hi = jax.lax.Precision.HIGHEST
    proj = jnp.einsum("bkh,oh->bko", encoder_outputs, weight, precision=hi)
    scores = jnp.einsum("bqo,bko->bqk", decoder_hidden, proj, precision=hi)
    w = jax.nn.softmax(scores, axis=-1)
    ctx = jnp.einsum("bqk,bkh->bqh", w, encoder_outputs, precision=hi)
    return ctx, w


if __name__ == "__main__":
    # Small but TPU-friendly shapes: lane-dense (128-wide) last dims for
    # enc / ctx / attn_weights.
    B, Tq, Tk, H = 4, 8, 128, 128

    key = jax.random.PRNGKey(0)
    k_dec, k_enc, k_w = jax.random.split(key, 3)

    # Modest activation scale keeps the softmax away from fully-saturated
    # one-hot rows so the numerical comparison below is meaningful.
    decoder_hidden = 0.5 * jax.random.normal(k_dec, (B, Tq, H), dtype=jnp.float32)
    encoder_outputs = 0.5 * jax.random.normal(k_enc, (B, Tk, H), dtype=jnp.float32)

    # Deterministic xavier_uniform init for nn.Linear(H, H, bias=False):
    # weight shape (out, in) = (H, H), bound = sqrt(6 / (fan_in + fan_out)).
    bound = math.sqrt(6.0 / (H + H))
    weight = jax.random.uniform(k_w, (H, H), minval=-bound, maxval=bound,
                                dtype=jnp.float32)

    ctx, attw = luong_attention(decoder_hidden, encoder_outputs, weight)
    jax.block_until_ready((ctx, attw))

    ref_ctx, ref_attw = _reference(decoder_hidden, encoder_outputs, weight)

    # Exact softmax division in-kernel -> attention rows sum to 1 tightly.
    assert jnp.allclose(jnp.sum(attw, axis=-1), 1.0, atol=1e-5)

    # Tolerance covers default-precision f32 matmuls (bf16 operand rounding on
    # the MXU and in interpret-mode execution of the kernel body); the
    # reference above runs at Precision.HIGHEST.
    assert jnp.allclose(attw, ref_attw, atol=2e-2, rtol=2e-2)
    assert jnp.allclose(ctx, ref_ctx, atol=2e-2, rtol=2e-2)

    print("KERNEL_OK")
</pallas_src>

<mosaic_0001>
module attributes {stable_mosaic.version = 11 : i64} {
  func.func @_luong_kernel(%arg0: i32, %arg1: memref<2x8x128xf32, #tpu.memory_space<vmem>>, %arg2: memref<2x128x128xf32, #tpu.memory_space<vmem>>, %arg3: memref<128x128xf32, #tpu.memory_space<vmem>>, %arg4: memref<2x8x128xf32, #tpu.memory_space<vmem>>, %arg5: memref<2x8x128xf32, #tpu.memory_space<vmem>>) attributes {dimension_semantics = [#tpu.dimension_semantics<parallel>], iteration_bounds = array<i64: 2>, scalar_prefetch = 0 : i64, scratch_operands = 0 : i64, tpu.core_type = #tpu.core_type<tc>, window_params = [{transform_indices = @transform_0, window_bounds = array<i64: 2, 8, 128>}, {transform_indices = @transform_1, window_bounds = array<i64: 2, 128, 128>}, {pipeline_mode = #tpu.pipeline_mode<synchronous>, transform_indices = @transform_2, window_bounds = array<i64: 128, 128>}, {transform_indices = @transform_3, window_bounds = array<i64: 2, 8, 128>}, {transform_indices = @transform_4, window_bounds = array<i64: 2, 8, 128>}]} {
    %c0 = arith.constant 0 : index
    %c0_0 = arith.constant 0 : index
    %c0_1 = arith.constant 0 : index
    %0 = vector.load %arg1[%c0, %c0_0, %c0_1] : memref<2x8x128xf32, #tpu.memory_space<vmem>>, vector<2x8x128xf32>
    %c0_2 = arith.constant 0 : index
    %c0_3 = arith.constant 0 : index
    %c0_4 = arith.constant 0 : index
    %1 = vector.load %arg2[%c0_2, %c0_3, %c0_4] : memref<2x128x128xf32, #tpu.memory_space<vmem>>, vector<2x128x128xf32>
    %c0_5 = arith.constant 0 : index
    %c0_6 = arith.constant 0 : index
    %2 = vector.load %arg3[%c0_5, %c0_6] : memref<128x128xf32, #tpu.memory_space<vmem>>, vector<128x128xf32>
    %3 = vector.shape_cast %0 : vector<2x8x128xf32> to vector<16x128xf32>
    %cst = arith.constant dense<0.000000e+00> : vector<16x128xf32>
    %4 = tpu.matmul %3, %2, %cst {dimension_numbers = #tpu.dot_dimension_numbers<[1], [0], [0], [1], [0, 0, 1, 1], [], []>} : vector<16x128xf32>, vector<128x128xf32>, vector<16x128xf32> -> vector<16x128xf32>
    %5 = vector.shape_cast %4 : vector<16x128xf32> to vector<2x8x128xf32>
    "tpu.trace_start"() <{level = 10 : i32, message = "bqh,bkh->bqk"}> : () -> ()
    %cst_7 = arith.constant dense<0.000000e+00> : vector<2x8x128xf32>
    %6 = tpu.matmul %5, %1, %cst_7 {dimension_numbers = #tpu.dot_dimension_numbers<[2], [2], [1], [1], [0, 0, 0, 1, 1, 1], [0], [0]>} : vector<2x8x128xf32>, vector<2x128x128xf32>, vector<2x8x128xf32> -> vector<2x8x128xf32>
    "tpu.trace_stop"() : () -> ()
    %cst_8 = arith.constant dense<0xFF800000> : vector<2x8xf32>
    %7 = vector.multi_reduction <maximumf>, %6, %cst_8 [2] : vector<2x8x128xf32> to vector<2x8xf32>
    %8 = vector.shape_cast %7 : vector<2x8xf32> to vector<2x8x1xf32>
    %9 = vector.broadcast %8 : vector<2x8x1xf32> to vector<2x8x128xf32>
    %10 = arith.subf %6, %9 : vector<2x8x128xf32>
    %11 = math.exp %10 : vector<2x8x128xf32>
    %cst_9 = arith.constant dense<0.000000e+00> : vector<2x8xf32>
    %12 = vector.multi_reduction <add>, %11, %cst_9 [2] : vector<2x8x128xf32> to vector<2x8xf32>
    %13 = vector.shape_cast %12 : vector<2x8xf32> to vector<2x8x1xf32>
    %cst_10 = arith.constant 1.000000e+00 : f32
    %14 = vector.broadcast %cst_10 : f32 to vector<2x8x1xf32>
    %15 = arith.divf %14, %13 : vector<2x8x1xf32>
    %16 = vector.broadcast %15 : vector<2x8x1xf32> to vector<2x8x128xf32>
    %17 = arith.mulf %11, %16 : vector<2x8x128xf32>
    "tpu.trace_start"() <{level = 10 : i32, message = "bqk,bkh->bqh"}> : () -> ()
    %cst_11 = arith.constant dense<0.000000e+00> : vector<2x8x128xf32>
    %18 = tpu.matmul %17, %1, %cst_11 {dimension_numbers = #tpu.dot_dimension_numbers<[2], [1], [1], [2], [0, 0, 0, 1, 1, 2], [0], [0]>} : vector<2x8x128xf32>, vector<2x128x128xf32>, vector<2x8x128xf32> -> vector<2x8x128xf32>
    "tpu.trace_stop"() : () -> ()
    %c0_12 = arith.constant 0 : index
    %c0_13 = arith.constant 0 : index
    %c0_14 = arith.constant 0 : index
    %19 = vector.load %arg4[%c0_12, %c0_13, %c0_14] : memref<2x8x128xf32, #tpu.memory_space<vmem>>, vector<2x8x128xf32>
    tpu.vector_store %arg4[%c0_12, %c0_13, %c0_14], %18 {strides = array<i32>} : memref<2x8x128xf32, #tpu.memory_space<vmem>>, vector<2x8x128xf32>,
    %c0_15 = arith.constant 0 : index
    %c0_16 = arith.constant 0 : index
    %c0_17 = arith.constant 0 : index
    %20 = vector.load %arg5[%c0_15, %c0_16, %c0_17] : memref<2x8x128xf32, #tpu.memory_space<vmem>>, vector<2x8x128xf32>
    tpu.vector_store %arg5[%c0_15, %c0_16, %c0_17], %17 {strides = array<i32>} : memref<2x8x128xf32, #tpu.memory_space<vmem>>, vector<2x8x128xf32>,
    return
  }
  func.func @transform_0(%arg0: i32) -> (i32, i32, i32) {
    %c0_i32 = arith.constant 0 : i32
    %c0_i32_0 = arith.constant 0 : i32
    %c0_i32_1 = arith.constant 0 : i32
    return %arg0, %c0_i32, %c0_i32_0 : i32, i32, i32
  }
  func.func @transform_1(%arg0: i32) -> (i32, i32, i32) {
    %c0_i32 = arith.constant 0 : i32
    %c0_i32_0 = arith.constant 0 : i32
    %c0_i32_1 = arith.constant 0 : i32
    return %arg0, %c0_i32, %c0_i32_0 : i32, i32, i32
  }
  func.func @transform_2(%arg0: i32) -> (i32, i32) {
    %c0_i32 = arith.constant 0 : i32
    %c0_i32_0 = arith.constant 0 : i32
    %c0_i32_1 = arith.constant 0 : i32
    return %c0_i32, %c0_i32_0 : i32, i32
  }
  func.func @transform_3(%arg0: i32) -> (i32, i32, i32) {
    %c0_i32 = arith.constant 0 : i32
    %c0_i32_0 = arith.constant 0 : i32
    %c0_i32_1 = arith.constant 0 : i32
    return %arg0, %c0_i32, %c0_i32_0 : i32, i32, i32
  }
  func.func @transform_4(%arg0: i32) -> (i32, i32, i32) {
    %c0_i32 = arith.constant 0 : i32
    %c0_i32_0 = arith.constant 0 : i32
    %c0_i32_1 = arith.constant 0 : i32
    return %arg0, %c0_i32, %c0_i32_0 : i32, i32, i32
  }
}

</mosaic_0001>

<llo_original>
// kernel: tpu_custom_call.1
$region0: #{tpu_custom_call.1}
  #allocation0 [shape = 'u32[]', space=smem, size = 0x4, offset = 0x4, fixed_abs, tag = 'smem constant byte address 0x4 - core index']
  #allocation1 [shape = 'u32[72,128]{1,0:T(1,128)}', space=vmem, size = 0x9000, scoped, tag = 'internal scratch']
  %s0 = inlined_call_operand.hbm [shape: f32[4,8,128], index: 0, kind: input, shape index: {}]
  %s1 = inlined_call_operand.hbm [shape: f32[4,128,128], index: 1, kind: input, shape index: {}]
  %s2 = inlined_call_operand.hbm [shape: f32[128,128], index: 2, kind: input, shape index: {}]
  %s3 = inlined_call_operand.hbm [shape: f32[4,8,128], index: 3, kind: output, shape index: {0}]
  %s4 = inlined_call_operand.hbm [shape: f32[4,8,128], index: 4, kind: output, shape index: {1}]
  %5 = xla_tuple %s3, %s4
  %s6 = sld [smem:[#allocation0]]
  $region65: #{tpu_custom_call.1} parent=0
    _
  %s8 = ssub.s32 1, %s6
  %s9 = scalar_select 0, %s8, %s6
  $region1: #{tpu_custom_call.1} parent=0
    #allocation2 [shape = 'u8[16384]{0}', space=vmem, size = 0x4000, scoped, tag = 'input window, operand 0']
    #allocation3 [shape = 's32[2]{0}', space=sflag, size = 0x8, scoped, tag = 'scoped memory for tpu_custom_call.1']
    #allocation4 [shape = 's32[2]{0}', space=sflag, size = 0x8, scoped, tag = 'scoped memory for tpu_custom_call.1']
    #allocation5 [shape = 'u8[262144]{0}', space=vmem, size = 0x40000, scoped, tag = 'input window, operand 1']
    #allocation6 [shape = 's32[2]{0}', space=sflag, size = 0x8, scoped, tag = 'scoped memory for tpu_custom_call.1']
    #allocation7 [shape = 'u8[65536]{0}', space=vmem, size = 0x10000, scoped, tag = 'input window, operand 2, single buffered']
    #allocation8 [shape = 'u8[16384]{0}', space=vmem, size = 0x4000, scoped, tag = 'output window, operand 0']
    #allocation9 [shape = 'u8[16384]{0}', space=vmem, size = 0x4000, scoped, tag = 'output window, operand 1']
    #allocation10 [shape = 's32[2]{0}', space=sflag, size = 0x8, scoped, tag = 'scoped memory for tpu_custom_call.1']
    %10 = vsyncpa [#allocation3], 0
    %s11 = scalar_lea.sflag [#allocation3], 1
    %12 = vsyncpa %s11, 0
    %13 = vsyncpa [#allocation6], 0
    %s14 = scalar_lea.sflag [#allocation6], 1
    %15 = vsyncpa %s14, 0
    %16 = vsyncpa [#allocation4], 0
    %s17 = scalar_lea.sflag [#allocation4], 1
    %18 = vsyncpa %s17, 0
    %19 = vsyncpa [#allocation10], 0
    %s20 = scalar_lea.sflag [#allocation10], 1
    %21 = vsyncpa %s20, 0
    loop: start=0, step=1, limit=4
    $region2: #{tpu_custom_call.1} parent=1 // loop_pre_header
      _
    $region3: #{tpu_custom_call.1} parent=1 // loop_header
      %s23 = sphi 0, %s27
      %p24 = scmp.ge.s32.totalorder %s23, 4
      %s33 = sphi 0, %s35
      %s36 = sphi 0, %s33
      %s37 = sphi 0, %s36
      %s53 = sphi 0, %s37
      %s59 = sphi 0, %s61
      %s62 = sphi 0, %s59
      %s63 = sphi 0, %s62
      %s79 = sphi 0, %s63
      %s83 = sphi 0, %s83
      %s85 = sphi 0, %s83
      %s86 = sphi 0, %s85
      %s100 = sphi 0, %s86
      %s106 = sphi 0, %s108
      %s109 = sphi 0, %s106
      %s110 = sphi 0, %s109
      %s126 = sphi 0, %s110
      %s132 = sphi 0, %s134
      %s135 = sphi 0, %s132
      %s136 = sphi 0, %s135
      %s152 = sphi 0, %s136
    $region4: #{tpu_custom_call.1} parent=1 // loop_header_branch
      %26 = sbr.rel (%p24) target = $region8
    $region5: #{tpu_custom_call.1} parent=1 // loop_body
      %s28 = ssub.s32 %s23, 1
      %s29 = ssub.s32 %s23, 2
      %s30 = sadd.s32 %s23, 1
      %s31 = ssub.s32 %s23, %s30
      %p32 = scmp.eq.s32.totalorder %s31, 0
      %s34 = sadd.s32 %s33, 1
      %s35 = scalar_select %p32, %s33, %s34
      %p38 = pneg %p32
      %p39 = scmp.eq.s32.totalorder %s23, 1
      %p40 = por %p38, %p39
      %p41 = scmp.ne.s32.totalorder %s33, %s36
      %p42 = scmp.eq.s32.totalorder %s23, 0
      %p43 = por %p41, %p42
      %p44 = scmp.ne.s32.totalorder %s33, %s36
      %p45 = scmp.eq.s32.totalorder %s28, 1
      %p46 = por %p44, %p45
      %p47 = scmp.ne.s32.totalorder %s36, %s37
      %p48 = scmp.eq.s32.totalorder %s28, 0
      %p49 = por %p47, %p48
      %p50 = scmp.ne.s32.totalorder %s36, %s37
      %p51 = scmp.eq.s32.totalorder %s29, 1
      %p52 = por %p50, %p51
      %p54 = scmp.ne.s32.totalorder %s37, %s53
      %p55 = scmp.eq.s32.totalorder %s29, 0
      %p56 = por %p54, %p55
      %s57 = ssub.s32 %s23, %s30
      %p58 = scmp.eq.s32.totalorder %s57, 0
      %s60 = sadd.s32 %s59, 1
      %s61 = scalar_select %p58, %s59, %s60
      %p64 = pneg %p58
      %p65 = scmp.eq.s32.totalorder %s23, 1
      %p66 = por %p64, %p65
      %p67 = scmp.ne.s32.totalorder %s59, %s62
      %p68 = scmp.eq.s32.totalorder %s23, 0
      %p69 = por %p67, %p68
      %p70 = scmp.ne.s32.totalorder %s59, %s62
      %p71 = scmp.eq.s32.totalorder %s28, 1
      %p72 = por %p70, %p71
      %p73 = scmp.ne.s32.totalorder %s62, %s63
      %p74 = scmp.eq.s32.totalorder %s28, 0
      %p75 = por %p73, %p74
      %p76 = scmp.ne.s32.totalorder %s62, %s63
      %p77 = scmp.eq.s32.totalorder %s29, 1
      %p78 = por %p76, %p77
      %p80 = scmp.ne.s32.totalorder %s63, %s79
      %p81 = scmp.eq.s32.totalorder %s29, 0
      %p82 = por %p80, %p81
      %s84 = sadd.s32 %s83, 1
      %p87 = scmp.eq.s32.totalorder %s23, 1
      %p88 = scmp.ne.s32.totalorder %s83, %s85
      %p89 = scmp.eq.s32.totalorder %s23, 0
      %p90 = por %p88, %p89
      %p91 = scmp.ne.s32.totalorder %s83, %s85
      %p92 = scmp.eq.s32.totalorder %s28, 1
      %p93 = por %p91, %p92
      %p94 = scmp.ne.s32.totalorder %s85, %s86
      %p95 = scmp.eq.s32.totalorder %s28, 0
      %p96 = por %p94, %p95
      %p97 = scmp.ne.s32.totalorder %s85, %s86
      %p98 = scmp.eq.s32.totalorder %s29, 1
      %p99 = por %p97, %p98
      %p101 = scmp.ne.s32.totalorder %s86, %s100
      %p102 = scmp.eq.s32.totalorder %s29, 0
      %p103 = por %p101, %p102
      %s104 = ssub.s32 %s23, %s30
      %p105 = scmp.eq.s32.totalorder %s104, 0
      %s107 = sadd.s32 %s106, 1
      %s108 = scalar_select %p105, %s106, %s107
      %p111 = pneg %p105
      %p112 = scmp.eq.s32.totalorder %s23, 1
      %p113 = por %p111, %p112
      %p114 = scmp.ne.s32.totalorder %s106, %s109
      %p115 = scmp.eq.s32.totalorder %s23, 0
      %p116 = por %p114, %p115
      %p117 = scmp.ne.s32.totalorder %s106, %s109
      %p118 = scmp.eq.s32.totalorder %s28, 1
      %p119 = por %p117, %p118
      %p120 = scmp.ne.s32.totalorder %s109, %s110
      %p121 = scmp.eq.s32.totalorder %s28, 0
      %p122 = por %p120, %p121
      %p123 = scmp.ne.s32.totalorder %s109, %s110
      %p124 = scmp.eq.s32.totalorder %s29, 1
      %p125 = por %p123, %p124
      %p127 = scmp.ne.s32.totalorder %s110, %s126
      %p128 = scmp.eq.s32.totalorder %s29, 0
      %p129 = por %p127, %p128
      %s130 = ssub.s32 %s23, %s30
      %p131 = scmp.eq.s32.totalorder %s130, 0
      %s133 = sadd.s32 %s132, 1
      %s134 = scalar_select %p131, %s132, %s133
      %p137 = pneg %p131
      %p138 = scmp.eq.s32.totalorder %s23, 1
      %p139 = por %p137, %p138
      %p140 = scmp.ne.s32.totalorder %s132, %s135
      %p141 = scmp.eq.s32.totalorder %s23, 0
      %p142 = por %p140, %p141
      %p143 = scmp.ne.s32.totalorder %s132, %s135
      %p144 = scmp.eq.s32.totalorder %s28, 1
      %p145 = por %p143, %p144
      %p146 = scmp.ne.s32.totalorder %s135, %s136
      %p147 = scmp.eq.s32.totalorder %s28, 0
      %p148 = por %p146, %p147
      %p149 = scmp.ne.s32.totalorder %s135, %s136
      %p150 = scmp.eq.s32.totalorder %s29, 1
      %p151 = por %p149, %p150
      %p153 = scmp.ne.s32.totalorder %s136, %s152
      %p154 = scmp.eq.s32.totalorder %s29, 0
      %p155 = por %p153, %p154
      %p156 = scmp.le.s32.totalorder 1, %s23
      %p157 = scmp.lt.s32.totalorder %s23, 3
      %p158 = pnand %p156, %p157
      %p159 = pneg %p158
      // Predicated region
      $region9: #{tpu_custom_call.1} parent=5 // pred_check
        _
      $region10: #{tpu_custom_call.1} parent=5 // pred_check_branch
        %161 = sbr.rel (%p158) target = $region12
      $region11: #{tpu_custom_call.1} parent=5 // pred_region
        %s162 = ssub.s32 %s23, 1
        // Predicated region
        $region13: #{tpu_custom_call.1} parent=11 // pred_check
          %p163 = pneg %p96
        $region14: #{tpu_custom_call.1} parent=11 // pred_check_branch
          %165 = sbr.rel (%p163) target = $region16
        $region15: #{tpu_custom_call.1} parent=11 // pred_region
          %167 = vsyncadd [#allocation6], 0
          %s168 = sshll.u32 %s2, 4
          %s169 = int_to_ptr.hbm [resolvable:$true] %s168
          %s170 = sshll.u32 [#allocation7], 4
          %s171 = int_to_ptr.vmem [resolvable:$true] %s170
          %176 = dma.hbm_to_vmem [thread:$0]  %s169, 2048, %s171, [#allocation6], 128, 128, 8
        $region16: #{tpu_custom_call.1} parent=11 // pred_fallthru
          _
      $region12: #{tpu_custom_call.1} parent=5 // pred_fallthru
        _
      %p177 = scmp.lt.s32.totalorder %s23, 2
      // Predicated region
      $region17: #{tpu_custom_call.1} parent=5 // pred_check
        %p178 = pneg %p177
      $region18: #{tpu_custom_call.1} parent=5 // pred_check_branch
        %180 = sbr.rel (%p178) target = $region20
      $region19: #{tpu_custom_call.1} parent=5 // pred_region
        // Predicated region
        $region21: #{tpu_custom_call.1} parent=19 // pred_check
          %p181 = pneg %p43
        $region22: #{tpu_custom_call.1} parent=19 // pred_check_branch
          %183 = sbr.rel (%p181) target = $region24
        $region23: #{tpu_custom_call.1} parent=19 // pred_region
          %s184 = sand.u32 %s33, 1
          %s185 = scalar_lea.sflag [#allocation3], %s184
          %s186 = sand.u32 %s33, 1
          %s187 = smul.addr %s186, 16
          %s188 = scalar_lea.vmem [#allocation2], %s187
          %s189 = smul.u32 2, %s23
          %191 = vsyncadd %s185, 0
          %s192 = smul.addr %s189, 8
          %s193 = scalar_lea.hbm %s0, %s192
          %s194 = sshll.u32 %s193, 4
          %s195 = int_to_ptr.hbm [resolvable:$true] %s194
          %s196 = sshll.u32 %s188, 4
          %s197 = int_to_ptr.vmem [resolvable:$true] %s196
          %202 = dma.hbm_to_vmem [thread:$0]  %s195, 256, %s197, %s185, 128, 128, 8
        $region24: #{tpu_custom_call.1} parent=19 // pred_fallthru
          _
        // Predicated region
        $region25: #{tpu_custom_call.1} parent=19 // pred_check
          %p203 = pneg %p69
        $region26: #{tpu_custom_call.1} parent=19 // pred_check_branch
          %205 = sbr.rel (%p203) target = $region28
        $region27: #{tpu_custom_call.1} parent=19 // pred_region
          %s206 = sand.u32 %s23, 1
          %s207 = scalar_lea.sflag [#allocation6], %s206
          %s208 = sand.u32 %s59, 1
          %s209 = smul.addr %s208, 256
          %s210 = scalar_lea.vmem [#allocation5], %s209
          %s211 = smul.u32 2, %s23
          %213 = vsyncadd %s207, 0
          %s214 = smul.addr %s211, 16
          %s215 = smul.addr %s214, 8
          %s216 = scalar_lea.hbm %s1, %s215
          %s217 = sshll.u32 %s216, 4
          %s218 = int_to_ptr.hbm [resolvable:$true] %s217
          %s219 = sshll.u32 %s210, 4
          %s220 = int_to_ptr.vmem [resolvable:$true] %s219
          %225 = dma.hbm_to_vmem [thread:$0]  %s218, 4096, %s220, %s207, 128, 128, 8
        $region28: #{tpu_custom_call.1} parent=19 // pred_fallthru
          _
      $region20: #{tpu_custom_call.1} parent=5 // pred_fallthru
        _
      %p226 = scmp.le.s32.totalorder 1, %s23
      %p227 = scmp.lt.s32.totalorder %s23, 3
      %p228 = pnand %p226, %p227
      %p229 = pneg %p228
      // Predicated region
      $region29: #{tpu_custom_call.1} parent=5 // pred_check
        _
      $region30: #{tpu_custom_call.1} parent=5 // pred_check_branch
        %231 = sbr.rel (%p228) target = $region32
      $region31: #{tpu_custom_call.1} parent=5 // pred_region
        %s232 = ssub.s32 %s23, 1
        %s233 = sand.u32 %s36, 1
        %s234 = scalar_lea.sflag [#allocation3], %s233
        %s235 = sand.u32 %s36, 1
        %s236 = smul.addr %s235, 16
        %s237 = scalar_lea.vmem [#allocation2], %s236
        // Predicated region
        $region33: #{tpu_custom_call.1} parent=31 // pred_check
          %p238 = pneg %p49
        $region34: #{tpu_custom_call.1} parent=31 // pred_check_branch
          %240 = sbr.rel (%p238) target = $region36
        $region35: #{tpu_custom_call.1} parent=31 // pred_region
          %242 = dma.done %s234, 256
        $region36: #{tpu_custom_call.1} parent=31 // pred_fallthru
          _
        %s243 = sand.u32 %s28, 1
        %s244 = scalar_lea.sflag [#allocation6], %s243
        %s245 = sand.u32 %s62, 1
        %s246 = smul.addr %s245, 256
        %s247 = scalar_lea.vmem [#allocation5], %s246
        // Predicated region
        $region37: #{tpu_custom_call.1} parent=31 // pred_check
          %p248 = pneg %p75
        $region38: #{tpu_custom_call.1} parent=31 // pred_check_branch
          %250 = sbr.rel (%p248) target = $region40
        $region39: #{tpu_custom_call.1} parent=31 // pred_region
          %252 = dma.done %s244, 4096
        $region40: #{tpu_custom_call.1} parent=31 // pred_fallthru
          _
        // Predicated region
        $region41: #{tpu_custom_call.1} parent=31 // pred_check
          %p253 = pneg %p96
        $region42: #{tpu_custom_call.1} parent=31 // pred_check_branch
          %255 = sbr.rel (%p253) target = $region44
        $region43: #{tpu_custom_call.1} parent=31 // pred_region
          %257 = dma.done [#allocation6], 2048
        $region44: #{tpu_custom_call.1} parent=31 // pred_fallthru
          _
        %s258 = sand.u32 %s36, 1
        %s259 = scalar_lea.sflag [#allocation3], %s258
        %s260 = sand.u32 %s36, 1
        %s261 = smul.addr %s260, 16
        %s262 = scalar_lea.vmem [#allocation2], %s261
        %p263 = pneg %p49
        %p264 = pneg %p46
        %s265 = sand.u32 %s28, 1
        %s266 = scalar_lea.sflag [#allocation6], %s265
        %s267 = sand.u32 %s62, 1
        %s268 = smul.addr %s267, 256
        %s269 = scalar_lea.vmem [#allocation5], %s268
        %p270 = pneg %p75
        %p271 = pneg %p72
        %p272 = pneg %p96
        %p273 = pneg %p93
        %p274 = pneg %p122
        %p275 = pneg %p119
        %s276 = sand.u32 %s109, 1
        %s277 = scalar_lea.sflag [#allocation4], %s276
        %s278 = sand.u32 %s109, 1
        %s279 = smul.addr %s278, 16
        %s280 = scalar_lea.vmem [#allocation8], %s279
        %p281 = pneg %p148
        %p282 = pneg %p145
        %s283 = sand.u32 %s135, 1
        %s284 = scalar_lea.sflag [#allocation10], %s283
        %s285 = sand.u32 %s135, 1
        %s286 = smul.addr %s285, 16
        %s287 = scalar_lea.vmem [#allocation9], %s286
        %s288 = smul.u32 2, %s28
        %s289 = smul.u32 2, %s28
        %s290 = smul.u32 2, %s28
        %s291 = smul.u32 2, %s28
        %v292 = vld [vmem:[%s237] sm:$0xff]
        %v293 = vld [vmem:[%s237 + $0x8] sm:$0xff]
        %v294 = vld [vmem:[%s247] sm:$0xff]
        %v295 = vld [vmem:[%s247 + $0x8] sm:$0xff]
        %v296 = vld [vmem:[%s247 + $0x10] sm:$0xff]
        %v297 = vld [vmem:[%s247 + $0x18] sm:$0xff]
        %v298 = vld [vmem:[%s247 + $0x20] sm:$0xff]
        %v299 = vld [vmem:[%s247 + $0x28] sm:$0xff]
        %v300 = vld [vmem:[%s247 + $0x30] sm:$0xff]
        %v301 = vld [vmem:[%s247 + $0x38] sm:$0xff]
        %v302 = vld [vmem:[%s247 + $0x40] sm:$0xff]
        %v303 = vld [vmem:[%s247 + $0x48] sm:$0xff]
        %v304 = vld [vmem:[%s247 + $0x50] sm:$0xff]
        %v305 = vld [vmem:[%s247 + $0x58] sm:$0xff]
        %v306 = vld [vmem:[%s247 + $0x60] sm:$0xff]
        %v307 = vld [vmem:[%s247 + $0x68] sm:$0xff]
        %v308 = vld [vmem:[%s247 + $0x70] sm:$0xff]
        %v309 = vld [vmem:[%s247 + $0x78] sm:$0xff]
        %v310 = vld [vmem:[%s247 + $0x80] sm:$0xff]
        %v311 = vld [vmem:[%s247 + $0x88] sm:$0xff]
        %v312 = vld [vmem:[%s247 + $0x90] sm:$0xff]
        %v313 = vld [vmem:[%s247 + $0x98] sm:$0xff]
        %v314 = vld [vmem:[%s247 + $0xa0] sm:$0xff]
        %v315 = vld [vmem:[%s247 + $0xa8] sm:$0xff]
        %v316 = vld [vmem:[%s247 + $0xb0] sm:$0xff]
        %v317 = vld [vmem:[%s247 + $0xb8] sm:$0xff]
        %v318 = vld [vmem:[%s247 + $0xc0] sm:$0xff]
        %v319 = vld [vmem:[%s247 + $0xc8] sm:$0xff]
        %v320 = vld [vmem:[%s247 + $0xd0] sm:$0xff]
        %v321 = vld [vmem:[%s247 + $0xd8] sm:$0xff]
        %v322 = vld [vmem:[%s247 + $0xe0] sm:$0xff]
        %v323 = vld [vmem:[%s247 + $0xe8] sm:$0xff]
        %v324 = vld [vmem:[%s247 + $0xf0] sm:$0xff]
        %v325 = vld [vmem:[%s247 + $0xf8] sm:$0xff]
        %v326 = vld [vmem:[#allocation7] sm:$0xff]
        %v327 = vld [vmem:[#allocation7 + $0x8] sm:$0xff]
        %v328 = vld [vmem:[#allocation7 + $0x10] sm:$0xff]
        %v329 = vld [vmem:[#allocation7 + $0x18] sm:$0xff]
        %v330 = vld [vmem:[#allocation7 + $0x20] sm:$0xff]
        %v331 = vld [vmem:[#allocation7 + $0x28] sm:$0xff]
        %v332 = vld [vmem:[#allocation7 + $0x30] sm:$0xff]
        %v333 = vld [vmem:[#allocation7 + $0x38] sm:$0xff]
        %v334 = vld [vmem:[#allocation7 + $0x40] sm:$0xff]
        %v335 = vld [vmem:[#allocation7 + $0x48] sm:$0xff]
        %v336 = vld [vmem:[#allocation7 + $0x50] sm:$0xff]
        %v337 = vld [vmem:[#allocation7 + $0x58] sm:$0xff]
        %v338 = vld [vmem:[#allocation7 + $0x60] sm:$0xff]
        %v339 = vld [vmem:[#allocation7 + $0x68] sm:$0xff]
        %v340 = vld [vmem:[#allocation7 + $0x70] sm:$0xff]
        %v341 = vld [vmem:[#allocation7 + $0x78] sm:$0xff]
        %342 = vmatpush.msra.mxu0 %v341
        %343 = vmatpush.msra.mxu0 %v340
        %344 = vmatpush.msra.mxu0 %v339
        %345 = vmatpush.msra.mxu0 %v338
        %346 = vmatpush.msra.mxu0 %v337
        %347 = vmatpush.msra.mxu0 %v336
        %348 = vmatpush.msra.mxu0 %v335
        %349 = vmatpush.msra.mxu0 %v334
        %350 = vmatpush.msra.mxu0 %v333
        %351 = vmatpush.msra.mxu0 %v332
        %352 = vmatpush.msra.mxu0 %v331
        %353 = vmatpush.msra.mxu0 %v330
        %354 = vmatpush.msra.mxu0 %v329
        %355 = vmatpush.msra.mxu0 %v328
        %356 = vmatpush.msra.mxu0 %v327
        %357 = vmatpush.msra.mxu0 %v326
        %358 = vmatmul.f32.gmra.mxu0 %v292
        %v359 = vpop.f32.mrf.mxu0
        %v360 = vadd.f32 0.0, %v359
        %361 = vmatmul.f32.gmra.mxu0 %v293
        %v362 = vpop.f32.mrf.mxu0
        %v363 = vadd.f32 0.0, %v362
        %364 = vdwg.mxu0
        %365 = vmatpush.xpose.msra.mxu0 %v309
        %366 = vmatpush.xpose.msra.mxu0 %v308
        %367 = vmatpush.xpose.msra.mxu0 %v307
        %368 = vmatpush.xpose.msra.mxu0 %v306
        %369 = vmatpush.xpose.msra.mxu0 %v305
        %370 = vmatpush.xpose.msra.mxu0 %v304
        %371 = vmatpush.xpose.msra.mxu0 %v303
        %372 = vmatpush.xpose.msra.mxu0 %v302
        %373 = vmatpush.xpose.msra.mxu0 %v301
        %374 = vmatpush.xpose.msra.mxu0 %v300
        %375 = vmatpush.xpose.msra.mxu0 %v299
        %376 = vmatpush.xpose.msra.mxu0 %v298
        %377 = vmatpush.xpose.msra.mxu0 %v297
        %378 = vmatpush.xpose.msra.mxu0 %v296
        %379 = vmatpush.xpose.msra.mxu0 %v295
        %380 = vmatpush.xpose.msra.mxu0 %v294
        %381 = vmatmul.f32.gmra.mxu0 %v360
        %v382 = vpop.f32.mrf.mxu0
        %v383 = vadd.f32 0.0, %v382
        %384 = vdwg.mxu0
        %385 = vmatpush.xpose.msra.mxu0 %v325
        %386 = vmatpush.xpose.msra.mxu0 %v324
        %387 = vmatpush.xpose.msra.mxu0 %v323
        %388 = vmatpush.xpose.msra.mxu0 %v322
        %389 = vmatpush.xpose.msra.mxu0 %v321
        %390 = vmatpush.xpose.msra.mxu0 %v320
        %391 = vmatpush.xpose.msra.mxu0 %v319
        %392 = vmatpush.xpose.msra.mxu0 %v318
        %393 = vmatpush.xpose.msra.mxu0 %v317
        %394 = vmatpush.xpose.msra.mxu0 %v316
        %395 = vmatpush.xpose.msra.mxu0 %v315
        %396 = vmatpush.xpose.msra.mxu0 %v314
        %397 = vmatpush.xpose.msra.mxu0 %v313
        %398 = vmatpush.xpose.msra.mxu0 %v312
        %399 = vmatpush.xpose.msra.mxu0 %v311
        %400 = vmatpush.xpose.msra.mxu0 %v310
        %401 = vmatmul.f32.gmra.mxu0 %v363
        %v402 = vpop.f32.mrf.mxu0
        %v403 = vadd.f32 0.0, %v402
        %404 = vdwg.mxu0
        %405 = vmax.xlane.f32.xlu0 %v383
        %v406 = vpop.xlane.xlu0 %405
        %407 = vmax.xlane.f32.xlu0 %v403
        %v408 = vpop.xlane.xlu0 %407
        %v409 = vsub.f32 %v383, %v406
        %v410 = vsub.f32 %v403, %v408
        %v411 = vmul.f32 %v409, 1.442695
        %v412 = vpow.pop %v411
        %v413 = vmul.f32 %v410, 1.442695
        %v414 = vpow.pop %v413
        %415 = vadd.xlane.f32.xlu0 %v412
        %v416 = vpop.xlane.xlu0 %415
        %417 = vadd.xlane.f32.xlu0 %v414
        %v418 = vpop.xlane.xlu0 %417
        %v419 = vrcp.pop %v416
        %v420 = vmul.f32 %v416, %v419
        %v421 = vsub.f32 1.0, %v420
        %v422 = vmul.f32 %v419, %v421
        %v423 = vadd.f32 %v419, %v422
        %vm424 = vweird.f32 %v416
        %vm425 = vweird.f32 %v419
        %vm426 = vmor %vm424, %vm425
        %v427 = vsel %vm426, %v419, %v423
        %v428 = vand.u32 2147483647, %v416
        %vm429 = vcmp.eq.f32.partialorder %v428, 8.507059e+37
        %v430 = vand.u32 %v416, 2147483648
        %v431 = vor.u32 1.1754944e-38, %v430
        %v432 = vsel %vm429, %v431, %v427
        %v433 = vmul.f32 1.0, %v432
        %v434 = vrcp.pop %v418
        %v435 = vmul.f32 %v418, %v434
        %v436 = vsub.f32 1.0, %v435
        %v437 = vmul.f32 %v434, %v436
        %v438 = vadd.f32 %v434, %v437
        %vm439 = vweird.f32 %v418
        %vm440 = vweird.f32 %v434
        %vm441 = vmor %vm439, %vm440
        %v442 = vsel %vm441, %v434, %v438
        %v443 = vand.u32 2147483647, %v418
        %vm444 = vcmp.eq.f32.partialorder %v443, 8.507059e+37
        %v445 = vand.u32 %v418, 2147483648
        %v446 = vor.u32 1.1754944e-38, %v445
        %v447 = vsel %vm444, %v446, %v442
        %v448 = vmul.f32 1.0, %v447
        %v449 = vmul.f32 %v412, %v433
        %v450 = vmul.f32 %v414, %v448
        %451 = vmatpush.msra.mxu0 %v309
        %452 = vmatpush.msra.mxu0 %v308
        %453 = vmatpush.msra.mxu0 %v307
        %454 = vmatpush.msra.mxu0 %v306
        %455 = vmatpush.msra.mxu0 %v305
        %456 = vmatpush.msra.mxu0 %v304
        %457 = vmatpush.msra.mxu0 %v303
        %458 = vmatpush.msra.mxu0 %v302
        %459 = vmatpush.msra.mxu0 %v301
        %460 = vmatpush.msra.mxu0 %v300
        %461 = vmatpush.msra.mxu0 %v299
        %462 = vmatpush.msra.mxu0 %v298
        %463 = vmatpush.msra.mxu0 %v297
        %464 = vmatpush.msra.mxu0 %v296
        %465 = vmatpush.msra.mxu0 %v295
        %466 = vmatpush.msra.mxu0 %v294
        %467 = vmatmul.f32.gmra.mxu0 %v449
        %v468 = vpop.f32.mrf.mxu0
        %v469 = vadd.f32 0.0, %v468
        %470 = vdwg.mxu0
        %471 = vmatpush.msra.mxu0 %v325
        %472 = vmatpush.msra.mxu0 %v324
        %473 = vmatpush.msra.mxu0 %v323
        %474 = vmatpush.msra.mxu0 %v322
        %475 = vmatpush.msra.mxu0 %v321
        %476 = vmatpush.msra.mxu0 %v320
        %477 = vmatpush.msra.mxu0 %v319
        %478 = vmatpush.msra.mxu0 %v318
        %479 = vmatpush.msra.mxu0 %v317
        %480 = vmatpush.msra.mxu0 %v316
        %481 = vmatpush.msra.mxu0 %v315
        %482 = vmatpush.msra.mxu0 %v314
        %483 = vmatpush.msra.mxu0 %v313
        %484 = vmatpush.msra.mxu0 %v312
        %485 = vmatpush.msra.mxu0 %v311
        %486 = vmatpush.msra.mxu0 %v310
        %487 = vmatmul.f32.gmra.mxu0 %v450
        %v488 = vpop.f32.mrf.mxu0
        %v489 = vadd.f32 0.0, %v488
        %490 = vdwg.mxu0
        %491 = vst [vmem:[%s280] sm:$0xff] %v469
        %492 = vst [vmem:[%s280 + $0x8] sm:$0xff] %v489
        %493 = vst [vmem:[%s287] sm:$0xff] %v449
        %494 = vst [vmem:[%s287 + $0x8] sm:$0xff] %v450
        %s495 = sand.u32 %s109, 1
        %s496 = scalar_lea.sflag [#allocation4], %s495
        %s497 = sand.u32 %s109, 1
        %s498 = smul.addr %s497, 16
        %s499 = scalar_lea.vmem [#allocation8], %s498
        %s500 = sand.u32 %s135, 1
        %s501 = scalar_lea.sflag [#allocation10], %s500
        %s502 = sand.u32 %s135, 1
        %s503 = smul.addr %s502, 16
        %s504 = scalar_lea.vmem [#allocation9], %s503
        // Predicated region
        $region45: #{tpu_custom_call.1} parent=31 // pred_check
          %p505 = pneg %p119
        $region46: #{tpu_custom_call.1} parent=31 // pred_check_branch
          %507 = sbr.rel (%p505) target = $region48
        $region47: #{tpu_custom_call.1} parent=31 // pred_region
          %s508 = smul.u32 2, %s28
          %510 = vsyncadd %s496, 0
          %s511 = smul.addr %s508, 8
          %s512 = scalar_lea.hbm %s3, %s511
          %s513 = sshll.u32 %s499, 4
          %s514 = int_to_ptr.vmem [resolvable:$true] %s513
          %s515 = sshll.u32 %s512, 4
          %s516 = int_to_ptr.hbm [resolvable:$true] %s515
          %521 = dma.vmem_to_hbm [thread:$0]  %s514, 256, %s516, %s496, 128, 128, 8
        $region48: #{tpu_custom_call.1} parent=31 // pred_fallthru
          _
        // Predicated region
        $region49: #{tpu_custom_call.1} parent=31 // pred_check
          %p522 = pneg %p145
        $region50: #{tpu_custom_call.1} parent=31 // pred_check_branch
          %524 = sbr.rel (%p522) target = $region52
        $region51: #{tpu_custom_call.1} parent=31 // pred_region
          %s525 = smul.u32 2, %s28
          %527 = vsyncadd %s501, 0
          %s528 = smul.addr %s525, 8
          %s529 = scalar_lea.hbm %s4, %s528
          %s530 = sshll.u32 %s504, 4
          %s531 = int_to_ptr.vmem [resolvable:$true] %s530
          %s532 = sshll.u32 %s529, 4
          %s533 = int_to_ptr.hbm [resolvable:$true] %s532
          %538 = dma.vmem_to_hbm [thread:$0]  %s531, 256, %s533, %s501, 128, 128, 8
        $region52: #{tpu_custom_call.1} parent=31 // pred_fallthru
          _
      $region32: #{tpu_custom_call.1} parent=5 // pred_fallthru
        _
      %p539 = scmp.le.s32.totalorder 2, %s23
      // Predicated region
      $region53: #{tpu_custom_call.1} parent=5 // pred_check
        %p540 = pneg %p539
      $region54: #{tpu_custom_call.1} parent=5 // pred_check_branch
        %542 = sbr.rel (%p540) target = $region56
      $region55: #{tpu_custom_call.1} parent=5 // pred_region
        %s543 = ssub.s32 %s23, 2
        // Predicated region
        $region57: #{tpu_custom_call.1} parent=55 // pred_check
          %p544 = pneg %p125
        $region58: #{tpu_custom_call.1} parent=55 // pred_check_branch
          %546 = sbr.rel (%p544) target = $region60
        $region59: #{tpu_custom_call.1} parent=55 // pred_region
          %s547 = sand.u32 %s110, 1
          %s548 = scalar_lea.sflag [#allocation4], %s547
          %s549 = sand.u32 %s110, 1
          %s550 = smul.addr %s549, 16
          %s551 = scalar_lea.vmem [#allocation8], %s550
          %553 = dma.done %s548, 256
        $region60: #{tpu_custom_call.1} parent=55 // pred_fallthru
          _
        // Predicated region
        $region61: #{tpu_custom_call.1} parent=55 // pred_check
          %p554 = pneg %p151
        $region62: #{tpu_custom_call.1} parent=55 // pred_check_branch
          %556 = sbr.rel (%p554) target = $region64
        $region63: #{tpu_custom_call.1} parent=55 // pred_region
          %s557 = sand.u32 %s136, 1
          %s558 = scalar_lea.sflag [#allocation10], %s557
          %s559 = sand.u32 %s136, 1
          %s560 = smul.addr %s559, 16
          %s561 = scalar_lea.vmem [#allocation9], %s560
          %563 = dma.done %s558, 256
        $region64: #{tpu_custom_call.1} parent=55 // pred_fallthru
          _
      $region56: #{tpu_custom_call.1} parent=5 // pred_fallthru
        _
    $region6: #{tpu_custom_call.1} parent=1 // loop_footer
      %s27 = sadd.s32 1, %s23
    $region7: #{tpu_custom_call.1} parent=1 // loop_footer_branch
      %22 = sbr.rel target = $region3
    $region8: #{tpu_custom_call.1} parent=1 // loop_exit
      _
    %564 = vsyncpa [#allocation3], 1
    %s565 = scalar_lea.sflag [#allocation3], 1
    %566 = vsyncpa %s565, 1
    %567 = vsyncpa [#allocation6], 1
    %s568 = scalar_lea.sflag [#allocation6], 1
    %569 = vsyncpa %s568, 1
    %570 = vsyncpa [#allocation4], 1
    %s571 = scalar_lea.sflag [#allocation4], 1
    %572 = vsyncpa %s571, 1
    %573 = vsyncpa [#allocation10], 1
    %s574 = scalar_lea.sflag [#allocation10], 1
    %575 = vsyncpa %s574, 1

</llo_original>
